<compile_context>
chip_gen: v5e
topology: v5e:2x2
jax: 0.10.0
libtpu: 0.0.40
codegen_flags: <defaults>
</compile_context>

<pallas_src>
import math

import jax
import jax.numpy as jnp
from jax.experimental import pallas as pl
from jax.experimental.pallas import tpu as pltpu


def make_positional_encoding_table(embedding_dim: int, max_len: int = 5000):
    """Deterministic 'buffer' construction, mirrors the PyTorch __init__."""
    position = jnp.arange(0, max_len, dtype=jnp.float32)[:, None]          # (max_len, 1)
    div_term = jnp.exp(
        jnp.arange(0, embedding_dim, 2, dtype=jnp.float32)
        * (-math.log(10000.0) / embedding_dim)
    )                                                                       # (E//2,)
    pe = jnp.zeros((max_len, embedding_dim), dtype=jnp.float32)
    pe = pe.at[:, 0::2].set(jnp.sin(position * div_term))
    pe = pe.at[:, 1::2].set(jnp.cos(position * div_term))
    return pe                                                               # (max_len, E)


def _vmem_capacity_bytes() -> int:
    """Physical VMEM per TensorCore (128 MiB v5e/v6e, 64 MiB v7x)."""
    try:
        return int(pltpu.get_tpu_info().vmem_capacity_bytes)
    except Exception:
        return 128 * 1024 * 1024


def _make_pe_add_kernel(n_seg: int, seg_width: int):
    """x/o blocks are (tile_s, n_seg*seg_width); pe block is (tile_s, seg_width) f32."""

    def kernel(x_ref, pe_ref, o_ref):
        pe = pe_ref[...]                                   # (tile_s, E) float32
        if n_seg == 1:
            o_ref[...] = (x_ref[...].astype(jnp.float32) + pe).astype(o_ref.dtype)
        else:
            # Static per-batch-segment add: keeps the pe footprint at one
            # (tile_s, E) tile (no B-way lane concat / no unbudgeted temp).
            for b in range(n_seg):
                sl = pl.ds(b * seg_width, seg_width)       # static lane offset
                o_ref[:, sl] = (x_ref[:, sl].astype(jnp.float32) + pe).astype(o_ref.dtype)

    return kernel


def positional_encoding_forward(x, pe_table, *, tile_s=None,
                                target_block_bytes=None, in_place=False):
    """x: (S, B, E); pe_table: (max_len, E) float32. Returns (S, B, E).

    Set in_place=True only when the caller donates x
    (jax.jit(..., donate_argnums=0)); otherwise leave it False so XLA does
    not insert a defensive copy of x in front of the aliased custom call.
    """
    S, B, E = x.shape
    BE = B * E
    itemsize = jnp.dtype(x.dtype).itemsize
    sub = max(8, 32 // itemsize)            # sublane tile: 8 f32 / 16 bf16 / 32 int8

    vmem_cap = _vmem_capacity_bytes()
    if target_block_bytes is None:
        # v5e/v6e (128 MiB VMEM): ~6 MiB blocks (>=85% of HBM roofline);
        # v7x (64 MiB VMEM): ~3 MiB blocks, leave headroom for both TCs.
        target_block_bytes = (6 << 20) if vmem_cap >= (96 << 20) else (3 << 20)

    # pe kept in float32; the add is done in f32 and cast on store.
    pe = pe_table[:S].astype(jnp.float32)                  # (S, E)
    x2d = x.reshape(S, BE)                                 # free contiguous reshape

    # Lane-axis guard: if even a minimum-height block over the full B*E lane
    # axis blows the per-block budget, tile the lane axis at batch-segment
    # granularity instead (requires lane-dense E).
    lane_fallback = (sub * BE * itemsize > target_block_bytes) and (E % 128 == 0)
    if lane_fallback:
        lane_w, n_seg = E, 1
    else:
        lane_w, n_seg = BE, B

    auto_tile = tile_s is None
    if auto_tile:
        rows = max(1, target_block_bytes // max(1, lane_w * itemsize))
        tile_s = max(sub, (rows // sub) * sub)
    tile_s = int(min(tile_s, S))

    # Guarantee a multi-step grid when S allows (pipelining + v7x megacore).
    n_steps = pl.cdiv(S, tile_s) * (B if lane_fallback else 1)
    if auto_tile and n_steps < 2 and S >= 2 * sub:
        tile_s = max(sub, ((S // 2) // sub) * sub)

    if lane_fallback:
        grid = (pl.cdiv(S, tile_s), B)
        in_specs = [
            pl.BlockSpec((tile_s, E), lambda i, j: (i, j)),    # x segment block
            pl.BlockSpec((tile_s, E), lambda i, j: (i, 0)),    # pe slice (ignores j)
        ]
        out_specs = pl.BlockSpec((tile_s, E), lambda i, j: (i, j))
        dims = ("parallel", "parallel")
    else:
        grid = (pl.cdiv(S, tile_s),)
        in_specs = [
            pl.BlockSpec((tile_s, BE), lambda i: (i, 0)),      # x slab block
            pl.BlockSpec((tile_s, E), lambda i: (i, 0)),       # pe slice (tiny)
        ]
        out_specs = pl.BlockSpec((tile_s, BE), lambda i: (i, 0))
        dims = ("parallel",)

    # VMEM budget: double-buffered x block + out block + f32 pe block + slack,
    # clamped well under physical VMEM (v7x has only 64 MiB per TC).
    x_block_bytes = tile_s * lane_w * itemsize
    pe_block_bytes = tile_s * E * 4
    needed = 2 * (2 * x_block_bytes + pe_block_bytes) + (2 << 20)
    vmem_cap_budget = min((vmem_cap * 3) // 4, 96 << 20)
    vmem_limit = int(min(max(needed, 16 << 20), vmem_cap_budget))

    cost = pl.CostEstimate(
        flops=S * B * E,
        transcendentals=0,
        bytes_accessed=2 * S * B * E * itemsize + S * E * 4,
    )

    out2d = pl.pallas_call(
        _make_pe_add_kernel(n_seg, E),
        out_shape=jax.ShapeDtypeStruct((S, BE), x.dtype),
        grid_spec=pltpu.PrefetchScalarGridSpec(
            num_scalar_prefetch=0,
            grid=grid,
            in_specs=in_specs,
            out_specs=out_specs,
        ),
        input_output_aliases=({0: 0} if in_place else {}),
        compiler_params=pltpu.CompilerParams(
            dimension_semantics=dims,
            vmem_limit_bytes=vmem_limit,
        ),
        cost_estimate=cost,
    )(x2d, pe)

    # Dropout in eval mode is identity.
    return out2d.reshape(S, B, E)


if __name__ == "__main__":
    seq_len, batch, embedding_dim = 24, 2, 32
    max_len = 64

    key = jax.random.PRNGKey(0)
    x = jax.random.normal(key, (seq_len, batch, embedding_dim), dtype=jnp.float32)
    pe_table = make_positional_encoding_table(embedding_dim, max_len)

    # Reference (plain JAX), computed before any donated call.
    ref = x + pe_table[:seq_len][:, None, :]

    fwd = jax.jit(positional_encoding_forward,
                  static_argnames=("tile_s", "target_block_bytes", "in_place"))

    # Default auto-tiling (no aliasing -> no defensive copy of x).
    y = jax.block_until_ready(fwd(x, pe_table))
    assert y.shape == (seq_len, batch, embedding_dim)
    assert jnp.allclose(y, ref, atol=1e-6, rtol=1e-6)

    # Force a multi-step pipelined grid (3 steps of 8 seq rows) and re-check.
    y2 = jax.block_until_ready(fwd(x, pe_table, tile_s=8))
    assert jnp.allclose(y2, ref, atol=1e-6, rtol=1e-6)

    # In-place path: alias is paired with a real donation so the output
    # writeback reuses the input pages (no extra HBM traffic).
    fwd_inplace = jax.jit(positional_encoding_forward, donate_argnums=0,
                          static_argnames=("tile_s", "target_block_bytes", "in_place"))
    x_donate = x + 0.0                      # fresh buffer we are allowed to donate
    y3 = jax.block_until_ready(fwd_inplace(x_donate, pe_table, in_place=True))
    assert jnp.allclose(y3, ref, atol=1e-6, rtol=1e-6)

    print("KERNEL_OK")
</pallas_src>

<mosaic_0001>
module attributes {stable_mosaic.version = 11 : i64} {
  func.func @kernel(%arg0: i32, %arg1: memref<8x64xf32, #tpu.memory_space<vmem>>, %arg2: memref<8x32xf32, #tpu.memory_space<vmem>>, %arg3: memref<8x64xf32, #tpu.memory_space<vmem>>) attributes {dimension_semantics = [#tpu.dimension_semantics<parallel>], iteration_bounds = array<i64: 3>, scalar_prefetch = 0 : i64, scratch_operands = 0 : i64, tpu.core_type = #tpu.core_type<tc>, window_params = [{transform_indices = @transform_0, window_bounds = array<i64: 8, 64>}, {transform_indices = @transform_1, window_bounds = array<i64: 8, 32>}, {transform_indices = @transform_2, window_bounds = array<i64: 8, 64>}]} {
    %c0 = arith.constant 0 : index
    %c0_0 = arith.constant 0 : index
    %0 = vector.load %arg2[%c0, %c0_0] : memref<8x32xf32, #tpu.memory_space<vmem>>, vector<8x32xf32>
    %c0_1 = arith.constant 0 : index
    %c0_2 = arith.constant 0 : index
    %1 = vector.load %arg1[%c0_1, %c0_2] : memref<8x64xf32, #tpu.memory_space<vmem>>, vector<8x32xf32>
    %2 = arith.addf %1, %0 : vector<8x32xf32>
    %c0_3 = arith.constant 0 : index
    %c0_4 = arith.constant 0 : index
    %3 = vector.load %arg3[%c0_3, %c0_4] : memref<8x64xf32, #tpu.memory_space<vmem>>, vector<8x32xf32>
    tpu.vector_store %arg3[%c0_3, %c0_4], %2 {strides = array<i32>} : memref<8x64xf32, #tpu.memory_space<vmem>>, vector<8x32xf32>,
    %c0_5 = arith.constant 0 : index
    %c32 = arith.constant 32 : index
    %4 = vector.load %arg1[%c0_5, %c32] : memref<8x64xf32, #tpu.memory_space<vmem>>, vector<8x32xf32>
    %5 = arith.addf %4, %0 : vector<8x32xf32>
    %c0_6 = arith.constant 0 : index
    %c32_7 = arith.constant 32 : index
    %6 = vector.load %arg3[%c0_6, %c32_7] : memref<8x64xf32, #tpu.memory_space<vmem>>, vector<8x32xf32>
    tpu.vector_store %arg3[%c0_6, %c32_7], %5 {strides = array<i32>} : memref<8x64xf32, #tpu.memory_space<vmem>>, vector<8x32xf32>,
    return
  }
  func.func @transform_0(%arg0: i32) -> (i32, i32) {
    %c0_i32 = arith.constant 0 : i32
    %c0_i32_0 = arith.constant 0 : i32
    return %arg0, %c0_i32 : i32, i32
  }
  func.func @transform_1(%arg0: i32) -> (i32, i32) {
    %c0_i32 = arith.constant 0 : i32
    %c0_i32_0 = arith.constant 0 : i32
    return %arg0, %c0_i32 : i32, i32
  }
  func.func @transform_2(%arg0: i32) -> (i32, i32) {
    %c0_i32 = arith.constant 0 : i32
    %c0_i32_0 = arith.constant 0 : i32
    return %arg0, %c0_i32 : i32, i32
  }
}

</mosaic_0001>

<llo_original>
// kernel: positional_encoding_forward.1
$region0: #{positional_encoding_forward.1}
  #allocation0 [shape = 'u32[]', space=smem, size = 0x4, offset = 0x4, fixed_abs, tag = 'smem constant byte address 0x4 - core index']
  #allocation1 [shape = 'u32[72,128]{1,0:T(1,128)}', space=vmem, size = 0x9000, scoped, tag = 'internal scratch']
  %s0 = inlined_call_operand.vmem [shape: f32[24,64], index: 0, kind: input, shape index: {}]
  %s1 = inlined_call_operand.vmem [shape: f32[24,32], index: 1, kind: input, shape index: {}]
  %s2 = inlined_call_operand.vmem [shape: f32[24,64], index: 2, kind: output, shape index: {}]
  %s3 = sld [smem:[#allocation0]]
  $region41: #{positional_encoding_forward.1} parent=0
    _
  %s5 = ssub.s32 1, %s3
  %s6 = scalar_select 0, %s5, %s3
  loop: start=0, step=1, limit=5
  $region2: #{positional_encoding_forward.1} parent=0 // loop_pre_header
    _
  $region3: #{positional_encoding_forward.1} parent=0 // loop_header
    %s8 = sphi 0, %s12
    %p9 = scmp.ge.s32.totalorder %s8, 5
    %s18 = sphi 0, %s20
    %s21 = sphi 0, %s18
    %s22 = sphi 0, %s21
    %s38 = sphi 0, %s22
    %s44 = sphi 0, %s46
    %s47 = sphi 0, %s44
    %s48 = sphi 0, %s47
    %s64 = sphi 0, %s48
    %s70 = sphi 0, %s72
    %s73 = sphi 0, %s70
    %s74 = sphi 0, %s73
    %s90 = sphi 0, %s74
  $region4: #{positional_encoding_forward.1} parent=0 // loop_header_branch
    %11 = sbr.rel (%p9) target = $region8
  $region5: #{positional_encoding_forward.1} parent=0 // loop_body
    %s13 = ssub.s32 %s8, 1
    %s14 = ssub.s32 %s8, 2
    %s15 = sadd.s32 %s8, 1
    %s16 = ssub.s32 %s8, %s15
    %p17 = scmp.eq.s32.totalorder %s16, 0
    %s19 = sadd.s32 %s18, 1
    %s20 = scalar_select %p17, %s18, %s19
    %p23 = pneg %p17
    %p24 = scmp.eq.s32.totalorder %s8, 2
    %p25 = por %p23, %p24
    %p26 = scmp.ne.s32.totalorder %s18, %s21
    %p27 = scmp.eq.s32.totalorder %s8, 0
    %p28 = por %p26, %p27
    %p29 = scmp.ne.s32.totalorder %s18, %s21
    %p30 = scmp.eq.s32.totalorder %s13, 2
    %p31 = por %p29, %p30
    %p32 = scmp.ne.s32.totalorder %s21, %s22
    %p33 = scmp.eq.s32.totalorder %s13, 0
    %p34 = por %p32, %p33
    %p35 = scmp.ne.s32.totalorder %s21, %s22
    %p36 = scmp.eq.s32.totalorder %s14, 2
    %p37 = por %p35, %p36
    %p39 = scmp.ne.s32.totalorder %s22, %s38
    %p40 = scmp.eq.s32.totalorder %s14, 0
    %p41 = por %p39, %p40
    %s42 = ssub.s32 %s8, %s15
    %p43 = scmp.eq.s32.totalorder %s42, 0
    %s45 = sadd.s32 %s44, 1
    %s46 = scalar_select %p43, %s44, %s45
    %p49 = pneg %p43
    %p50 = scmp.eq.s32.totalorder %s8, 2
    %p51 = por %p49, %p50
    %p52 = scmp.ne.s32.totalorder %s44, %s47
    %p53 = scmp.eq.s32.totalorder %s8, 0
    %p54 = por %p52, %p53
    %p55 = scmp.ne.s32.totalorder %s44, %s47
    %p56 = scmp.eq.s32.totalorder %s13, 2
    %p57 = por %p55, %p56
    %p58 = scmp.ne.s32.totalorder %s47, %s48
    %p59 = scmp.eq.s32.totalorder %s13, 0
    %p60 = por %p58, %p59
    %p61 = scmp.ne.s32.totalorder %s47, %s48
    %p62 = scmp.eq.s32.totalorder %s14, 2
    %p63 = por %p61, %p62
    %p65 = scmp.ne.s32.totalorder %s48, %s64
    %p66 = scmp.eq.s32.totalorder %s14, 0
    %p67 = por %p65, %p66
    %s68 = ssub.s32 %s8, %s15
    %p69 = scmp.eq.s32.totalorder %s68, 0
    %s71 = sadd.s32 %s70, 1
    %s72 = scalar_select %p69, %s70, %s71
    %p75 = pneg %p69
    %p76 = scmp.eq.s32.totalorder %s8, 2
    %p77 = por %p75, %p76
    %p78 = scmp.ne.s32.totalorder %s70, %s73
    %p79 = scmp.eq.s32.totalorder %s8, 0
    %p80 = por %p78, %p79
    %p81 = scmp.ne.s32.totalorder %s70, %s73
    %p82 = scmp.eq.s32.totalorder %s13, 2
    %p83 = por %p81, %p82
    %p84 = scmp.ne.s32.totalorder %s73, %s74
    %p85 = scmp.eq.s32.totalorder %s13, 0
    %p86 = por %p84, %p85
    %p87 = scmp.ne.s32.totalorder %s73, %s74
    %p88 = scmp.eq.s32.totalorder %s14, 2
    %p89 = por %p87, %p88
    %p91 = scmp.ne.s32.totalorder %s74, %s90
    %p92 = scmp.eq.s32.totalorder %s14, 0
    %p93 = por %p91, %p92
    %p94 = scmp.le.s32.totalorder 1, %s8
    %p95 = scmp.lt.s32.totalorder %s8, 4
    %p96 = pnand %p94, %p95
    %p97 = pneg %p96
    // Predicated region
    $region9: #{positional_encoding_forward.1} parent=5 // pred_check
      _
    $region10: #{positional_encoding_forward.1} parent=5 // pred_check_branch
      %99 = sbr.rel (%p96) target = $region12
    $region11: #{positional_encoding_forward.1} parent=5 // pred_region
      %s100 = ssub.s32 %s8, 1
    $region12: #{positional_encoding_forward.1} parent=5 // pred_fallthru
      _
    %p101 = scmp.lt.s32.totalorder %s8, 3
    // Predicated region
    $region13: #{positional_encoding_forward.1} parent=5 // pred_check
      %p102 = pneg %p101
    $region14: #{positional_encoding_forward.1} parent=5 // pred_check_branch
      %104 = sbr.rel (%p102) target = $region16
    $region15: #{positional_encoding_forward.1} parent=5 // pred_region
      // Predicated region
      $region17: #{positional_encoding_forward.1} parent=15 // pred_check
        %p105 = pneg %p28
      $region18: #{positional_encoding_forward.1} parent=15 // pred_check_branch
        %107 = sbr.rel (%p105) target = $region20
      $region19: #{positional_encoding_forward.1} parent=15 // pred_region
        %p108 = scmp.lt.s32.totalorder %s8, 2
        %s109 = scalar_select %p108, %s8, 2
        %s110 = smul.addr %s109, 8
        %s111 = scalar_lea.vmem %s0, %s110
      $region20: #{positional_encoding_forward.1} parent=15 // pred_fallthru
        _
      // Predicated region
      $region21: #{positional_encoding_forward.1} parent=15 // pred_check
        %p112 = pneg %p54
      $region22: #{positional_encoding_forward.1} parent=15 // pred_check_branch
        %114 = sbr.rel (%p112) target = $region24
      $region23: #{positional_encoding_forward.1} parent=15 // pred_region
        %p115 = scmp.lt.s32.totalorder %s8, 2
        %s116 = scalar_select %p115, %s8, 2
        %s117 = smul.addr %s116, 8
        %s118 = scalar_lea.vmem %s1, %s117
      $region24: #{positional_encoding_forward.1} parent=15 // pred_fallthru
        _
    $region16: #{positional_encoding_forward.1} parent=5 // pred_fallthru
      _
    %p119 = scmp.le.s32.totalorder 1, %s8
    %p120 = scmp.lt.s32.totalorder %s8, 4
    %p121 = pnand %p119, %p120
    %p122 = pneg %p121
    // Predicated region
    $region25: #{positional_encoding_forward.1} parent=5 // pred_check
      _
    $region26: #{positional_encoding_forward.1} parent=5 // pred_check_branch
      %124 = sbr.rel (%p121) target = $region28
    $region27: #{positional_encoding_forward.1} parent=5 // pred_region
      %s125 = ssub.s32 %s8, 1
      %p126 = scmp.lt.s32.totalorder %s13, 2
      %s127 = scalar_select %p126, %s13, 2
      %s128 = smul.addr %s127, 8
      %s129 = scalar_lea.vmem %s0, %s128
      %p130 = pneg %p34
      %p131 = pneg %p31
      %p132 = scmp.lt.s32.totalorder %s13, 2
      %s133 = scalar_select %p132, %s13, 2
      %s134 = smul.addr %s133, 8
      %s135 = scalar_lea.vmem %s1, %s134
      %p136 = pneg %p60
      %p137 = pneg %p57
      %p138 = pneg %p86
      %p139 = pneg %p83
      %p140 = scmp.lt.s32.totalorder %s13, 2
      %s141 = scalar_select %p140, %s13, 2
      %s142 = smul.addr %s141, 8
      %s143 = scalar_lea.vmem %s2, %s142
      %p144 = scmp.lt.s32.totalorder %s13, 2
      %s145 = scalar_select %p144, %s13, 2
      %s146 = smul.addr %s145, 8
      %s147 = scalar_lea.vmem %s0, %s146
      %p148 = scmp.lt.s32.totalorder %s13, 2
      %s149 = scalar_select %p148, %s13, 2
      %s150 = smul.addr %s149, 8
      %s151 = scalar_lea.vmem %s1, %s150
      %p152 = scmp.lt.s32.totalorder %s13, 2
      %s153 = scalar_select %p152, %s13, 2
      %s154 = smul.addr %s153, 8
      %s155 = scalar_lea.vmem %s2, %s154
      %v156 = vld [vmem:[%s151] sm:$0xff]
      %v157 = vld [vmem:[%s147] sm:$0xff]
      %v158 = vadd.f32 %v157, %v156
      %vm159 = vcmask 261120
      %160 = vst.msk [vmem:[%s155] sm:$0xff] %vm159, %v158
      %v161 = vld [vmem:[%s147] sm:$0xff]
      %163 = vrot.lane.b32.xlu0 %v156, 32
      %v164 = vpop.permute.xlu0 %163
      %v166 = vadd.f32 %v161, %v164
      %vm167 = vcmask 523520
      %168 = vst.msk [vmem:[%s155] sm:$0xff] %vm167, %v166
      %p169 = scmp.lt.s32.totalorder %s13, 2
      %s170 = scalar_select %p169, %s13, 2
      %s171 = smul.addr %s170, 8
      %s172 = scalar_lea.vmem %s2, %s171
      // Predicated region
      $region29: #{positional_encoding_forward.1} parent=27 // pred_check
        %p173 = pneg %p83
      $region30: #{positional_encoding_forward.1} parent=27 // pred_check_branch
        %175 = sbr.rel (%p173) target = $region32
      $region31: #{positional_encoding_forward.1} parent=27 // pred_region
        _
      $region32: #{positional_encoding_forward.1} parent=27 // pred_fallthru
        _
    $region28: #{positional_encoding_forward.1} parent=5 // pred_fallthru
      _
    %p176 = scmp.le.s32.totalorder 2, %s8
    // Predicated region
    $region33: #{positional_encoding_forward.1} parent=5 // pred_check
      %p177 = pneg %p176
    $region34: #{positional_encoding_forward.1} parent=5 // pred_check_branch
      %179 = sbr.rel (%p177) target = $region36
    $region35: #{positional_encoding_forward.1} parent=5 // pred_region
      %s180 = ssub.s32 %s8, 2
      // Predicated region
      $region37: #{positional_encoding_forward.1} parent=35 // pred_check
        %p181 = pneg %p89
      $region38: #{positional_encoding_forward.1} parent=35 // pred_check_branch
        %183 = sbr.rel (%p181) target = $region40
      $region39: #{positional_encoding_forward.1} parent=35 // pred_region
        %p184 = scmp.lt.s32.totalorder %s14, 2
        %s185 = scalar_select %p184, %s14, 2
        %s186 = smul.addr %s185, 8
        %s187 = scalar_lea.vmem %s2, %s186
      $region40: #{positional_encoding_forward.1} parent=35 // pred_fallthru
        _
    $region36: #{positional_encoding_forward.1} parent=5 // pred_fallthru
      _
  $region6: #{positional_encoding_forward.1} parent=0 // loop_footer
    %s12 = sadd.s32 1, %s8
  $region7: #{positional_encoding_forward.1} parent=0 // loop_footer_branch
    %7 = sbr.rel target = $region3
  $region8: #{positional_encoding_forward.1} parent=0 // loop_exit
    _

</llo_original>
